<compile_context>
chip_gen: v7x
topology: tpu7x:2x2x1
jax: 0.10.0
libtpu: 0.0.40
codegen_flags: <defaults>
</compile_context>

<pallas_src>
import numpy as np
import jax
import jax.numpy as jnp
from jax import lax
from jax.experimental import pallas as pl
from jax.experimental.pallas import tpu as pltpu

# ----------------------------- configuration --------------------------------
ALPHA = 0.5
SAMPLE_RATE = 64.0
FFTLENGTH = 1.0
OVERLAP = 0.5

NPERSEG = int(FFTLENGTH * SAMPLE_RATE)            # 64
NSTRIDE = NPERSEG - int(OVERLAP * SAMPLE_RATE)    # 32
NFREQ = NPERSEG // 2 + 1                          # 33

B, T = 2, 512
NCHUNK = T // NSTRIDE                             # 16 non-overlapping chunks / trace
NUM_SEG = NCHUNK - 1                              # 15 overlapping Welch segments
SEG_PAD = NUM_SEG + 1                             # 16 rows per stream block (+sentinel)
NSTREAM = 2 * B                                   # 4  = {res, tgt} x batch
LHS_ROWS = NSTREAM * SEG_PAD                      # 64
SPEC_COLS = 2 * NPERSEG                           # 128: Re in [0,33), Im in [64,97)
RHS_COLS = 2 * SPEC_COLS                          # 256: [M_top | M_bot]
MID = NUM_SEG // 2                                # median index (7) for odd NUM_SEG

assert NPERSEG == 2 * NSTRIDE                     # segment = two adjacent chunks
assert T % NSTRIDE == 0
assert NUM_SEG % 2 == 1                           # exact-middle median (no interp)
assert NUM_SEG == (T - NPERSEG) // NSTRIDE + 1
assert SEG_PAD & (SEG_PAD - 1) == 0               # power of two (mask with &)
assert LHS_ROWS == B * NCHUNK * 2                 # lhs = concat([res, tgt])


def _median_bias(n: int) -> float:
    # scipy.signal._spectral_py._median_bias (reference only; cancels in the
    # PSD ratio computed by the kernel).
    if n <= 1:
        return 1.0
    ii_2 = 2.0 * np.arange(1.0, (n - 1) // 2 + 1)
    return float(1.0 + np.sum(1.0 / (ii_2 + 1.0) - 1.0 / ii_2))


# torch.hann_window (periodic)
_WINDOW_NP = 0.5 * (1.0 - np.cos(2.0 * np.pi * np.arange(NPERSEG) / NPERSEG))
SCALE = float(1.0 / (SAMPLE_RATE * np.sum(_WINDOW_NP ** 2)))   # reference only
BIAS = _median_bias(NUM_SEG)                                    # reference only

# ---- fused (window + detrend + rFFT) split matrix, built once on the host ----
# rFFT as matmul: X[k] = sum_n x[n] (cos - i sin)(2 pi n k / P)
_n = np.arange(NPERSEG)[:, None]
_k = np.arange(NFREQ)[None, :]
_cos = np.cos(2.0 * np.pi * _n * _k / NPERSEG) * _WINDOW_NP[:, None]
_sin = -np.sin(2.0 * np.pi * _n * _k / NPERSEG) * _WINDOW_NP[:, None]

_dft = np.zeros((NPERSEG, SPEC_COLS), np.float64)
_dft[:, :NFREQ] = _cos                       # Re part, lanes [0, 33)
_dft[:, NPERSEG:NPERSEG + NFREQ] = _sin      # Im part, lanes [64, 97)
# fold per-segment mean removal:  (x - mean(x)) @ M  ==  x @ (M - 1*colsum(M)/P)
_dft_adj = _dft - _dft.sum(axis=0, keepdims=True) / NPERSEG
# split by segment half: lanes [0,128) act on chunk s, [128,256) on chunk s+1
_RHS_NP = np.concatenate([_dft_adj[:NSTRIDE, :], _dft_adj[NSTRIDE:, :]],
                         axis=1).astype(np.float32)              # (32, 256)

# segment gather indices -- used only by the pure-JAX reference
_SEG_IDX = (np.arange(NUM_SEG)[:, None] * NSTRIDE
            + np.arange(NPERSEG)[None, :])   # (NUM_SEG, NPERSEG)


# ------------------------------- kernel --------------------------------------
def composite_psd_loss_kernel(pred_ref, target_ref, dft_ref, out_ref):
    # pred/target: (B*NCHUNK, NSTRIDE) = (32, 32); row r = trace r//16, chunk r%16
    tgt = target_ref[...]
    res = tgt - pred_ref[...]

    # ---- all 4 streams as one sublane-aligned (64, 32) LHS -------------------
    # 16-row blocks: [res b0 | res b1 | tgt b0 | tgt b1]; each row = one chunk.
    lhs = jnp.concatenate([res, tgt], axis=0)                       # (64, 32)

    # ---- split-DFT matmul + sublane roll to assemble segment spectra ---------
    # spec_of_segment_s = chunk_s @ M_top + chunk_{s+1} @ M_bot
    spec2 = jnp.dot(lhs, dft_ref[...],
                    preferred_element_type=jnp.float32)             # (64, 256)
    top = spec2[:, :SPEC_COLS]                                      # chunk_r @ M_top
    bot = spec2[:, SPEC_COLS:]                                      # chunk_r @ M_bot
    # spec[i] = top[i] + bot[i+1]; local row 15 of each block is garbage and is
    # overwritten by the +inf sentinel below.
    spec = top + pltpu.roll(bot, shift=LHS_ROWS - 1, axis=0)        # (64, 128)

    # ---- periodogram: square at full lane width, fold Im half onto Re half ---
    sq = spec * spec
    p = sq + pltpu.roll(sq, shift=NPERSEG, axis=1)   # lanes [0,33): Re^2 + Im^2

    # ---- median over segments: bitonic sort of each 16-row block -------------
    row = lax.broadcasted_iota(jnp.int32, (LHS_ROWS, SPEC_COLS), 0)
    local = row & (SEG_PAD - 1)                      # row index within its block
    p = jnp.where(local == NUM_SEG, jnp.inf, p)      # sentinel in pad rows

    # 10 compare-exchange passes (k = 2,4,8,16; j = k/2..1).  Partner of row i
    # is i ^ j (never crosses its 16-row block); masks are recomputed from the
    # resident int32 `local` iota each pass to keep vreg pressure low.
    for k in (2, 4, 8, 16):
        j = k // 2
        while j >= 1:
            up = pltpu.roll(p, shift=LHS_ROWS - j, axis=0)   # up[i] = p[i + j]
            dn = pltpu.roll(p, shift=j, axis=0)              # dn[i] = p[i - j]
            bit_j = (local & j) != 0                         # partner is i - j
            partner = jnp.where(bit_j, dn, up)
            if k == SEG_PAD:                                 # final merge: ascending
                keep_min = jnp.logical_not(bit_j)
            else:
                keep_min = jnp.logical_xor((local & k) == 0, bit_j)
            p = jnp.where(keep_min,
                          jnp.minimum(p, partner),
                          jnp.maximum(p, partner))
            j //= 2
    # each 16-row block is now sorted ascending; median of 15 reals at local row 7

    # ---- PSD ratio (one-sided doubling / scale / median-bias cancel) ---------
    lane = lax.broadcasted_iota(jnp.int32, (1, SPEC_COLS), 1)
    fmask = lane < NFREQ
    ratio_sum = jnp.float32(0.0)
    for b in range(B):
        r_row = b * SEG_PAD + MID              # residual median rows: 7, 23
        t_row = (B + b) * SEG_PAD + MID        # target   median rows: 39, 55
        med_r = p[r_row:r_row + 1, :]
        med_t = jnp.where(fmask, p[t_row:t_row + 1, :], jnp.float32(1.0))
        # approx reciprocal (EUP): ~1e-4..1e-3 rel. error per bin, fine at rtol=1e-2
        ratio = med_r * pl.reciprocal(med_t, approx=True)
        ratio_sum = ratio_sum + jnp.sum(jnp.where(fmask, ratio, jnp.float32(0.0)))
    psd_loss = ratio_sum / (B * NFREQ)

    # ---- MSE ------------------------------------------------------------------
    mse = jnp.sum(res * res) / (B * T)

    out_ref[0, 0] = (ALPHA * psd_loss + (1.0 - ALPHA) * mse).astype(jnp.float32)


# ------------------------------- wrapper --------------------------------------
_COST = pl.CostEstimate(
    flops=2 * LHS_ROWS * NSTRIDE * RHS_COLS          # one (64,32)@(32,256) matmul
    + 80 * LHS_ROWS * SPEC_COLS,                     # sort + elementwise epilogue
    transcendentals=2 * SPEC_COLS,                   # approx reciprocals
    bytes_accessed=2 * (B * NCHUNK * NSTRIDE * 4) + NSTRIDE * RHS_COLS * 4 + 4,
)


@jax.jit
def composite_psd_loss(pred, target):
    # contiguity-preserving reshape only (no gather / no residual op before the
    # kernel): (B, T) -> (B*NCHUNK, NSTRIDE)
    pred = pred.astype(jnp.float32).reshape(B * NCHUNK, NSTRIDE)
    target = target.astype(jnp.float32).reshape(B * NCHUNK, NSTRIDE)
    dft = jnp.asarray(_RHS_NP)                               # (32, 256)

    out = pl.pallas_call(
        composite_psd_loss_kernel,
        out_shape=jax.ShapeDtypeStruct((1, 1), jnp.float32),
        in_specs=[pl.BlockSpec(memory_space=pltpu.MemorySpace.VMEM)] * 3,
        out_specs=pl.BlockSpec(memory_space=pltpu.MemorySpace.SMEM),
        cost_estimate=_COST,
    )(pred, target, dft)
    return out[0, 0]


# ------------------------- pure-JAX reference ---------------------------------
def _reference_loss(pred, target):
    window = jnp.asarray(_WINDOW_NP, jnp.float32)

    def welch_median(x):
        segs = x[:, _SEG_IDX]                                 # (B, S, P)
        segs = segs - segs.mean(axis=-1, keepdims=True)
        segs = segs * window
        fft = jnp.abs(jnp.fft.rfft(segs, axis=-1)) ** 2       # (B, S, F)
        fft = fft.at[..., 1:-1].multiply(2.0)
        fft = fft * SCALE
        return jnp.median(fft, axis=-2) / BIAS                # (B, F)

    res = target - pred
    psd = jnp.mean(welch_median(res) / welch_median(target))
    mse = jnp.mean(res ** 2)
    return ALPHA * psd + (1.0 - ALPHA) * mse


# --------------------------------- main ---------------------------------------
if __name__ == "__main__":
    key = jax.random.PRNGKey(0)
    kp, kt = jax.random.split(key)
    pred = jax.random.normal(kp, (B, T), dtype=jnp.float32)
    target = jax.random.normal(kt, (B, T), dtype=jnp.float32)

    loss = jax.block_until_ready(composite_psd_loss(pred, target))
    ref = jax.block_until_ready(_reference_loss(pred, target))

    np.testing.assert_allclose(np.asarray(loss), np.asarray(ref),
                               rtol=1e-2, atol=1e-5)
    print("KERNEL_OK")
</pallas_src>

<mosaic_0001>
module attributes {stable_mosaic.version = 11 : i64} {
  func.func @composite_psd_loss_kernel(%arg0: memref<32x32xf32, #tpu.memory_space<vmem>>, %arg1: memref<32x32xf32, #tpu.memory_space<vmem>>, %arg2: memref<32x256xf32, #tpu.memory_space<vmem>>, %arg3: memref<1x1xf32, #tpu.memory_space<smem>>) attributes {dimension_semantics = [], scalar_prefetch = 0 : i64, scratch_operands = 0 : i64, tpu.core_type = #tpu.core_type<tc>} {
    %c0 = arith.constant 0 : index
    %c0_0 = arith.constant 0 : index
    %0 = vector.load %arg1[%c0, %c0_0] : memref<32x32xf32, #tpu.memory_space<vmem>>, vector<32x32xf32>
    %c0_1 = arith.constant 0 : index
    %c0_2 = arith.constant 0 : index
    %1 = vector.load %arg0[%c0_1, %c0_2] : memref<32x32xf32, #tpu.memory_space<vmem>>, vector<32x32xf32>
    %2 = arith.subf %0, %1 : vector<32x32xf32>
    %3 = tpu.concatenate %2, %0 in 0 : vector<32x32xf32>, vector<32x32xf32> -> vector<64x32xf32>
    %c0_3 = arith.constant 0 : index
    %c0_4 = arith.constant 0 : index
    %4 = vector.load %arg2[%c0_3, %c0_4] : memref<32x256xf32, #tpu.memory_space<vmem>>, vector<32x256xf32>
    %cst = arith.constant dense<0.000000e+00> : vector<64x256xf32>
    %5 = tpu.matmul %3, %4, %cst {dimension_numbers = #tpu.dot_dimension_numbers<[1], [0], [0], [1], [0, 0, 1, 1], [], []>} : vector<64x32xf32>, vector<32x256xf32>, vector<64x256xf32> -> vector<64x256xf32>
    %6 = vector.extract_strided_slice %5 {offsets = [0, 0], sizes = [64, 128], strides = [1, 1]} : vector<64x256xf32> to vector<64x128xf32>
    %7 = vector.extract_strided_slice %5 {offsets = [0, 128], sizes = [64, 128], strides = [1, 1]} : vector<64x256xf32> to vector<64x128xf32>
    %c63_i32 = arith.constant 63 : i32
    %8 = tpu.dynamic_rotate %7 by %c63_i32 dim 0 : vector<64x128xf32>, i32 -> vector<64x128xf32>
    %9 = arith.addf %6, %8 : vector<64x128xf32>
    %10 = arith.mulf %9, %9 : vector<64x128xf32>
    %c64_i32 = arith.constant 64 : i32
    %11 = tpu.dynamic_rotate %10 by %c64_i32 dim 1 : vector<64x128xf32>, i32 -> vector<64x128xf32>
    %12 = arith.addf %10, %11 : vector<64x128xf32>
    %13 = tpu.iota {dimensions = array<i32: 0>} : vector<64x128xi32>
    %c15_i32 = arith.constant 15 : i32
    %14 = vector.broadcast %c15_i32 : i32 to vector<64x128xi32>
    %15 = arith.andi %13, %14 : vector<64x128xi32>
    %c15_i32_5 = arith.constant 15 : i32
    %16 = vector.broadcast %c15_i32_5 : i32 to vector<64x128xi32>
    %17 = arith.cmpi eq, %15, %16 : vector<64x128xi32>
    %cst_6 = arith.constant 0x7F800000 : f32
    %18 = vector.broadcast %cst_6 : f32 to vector<64x128xf32>
    %19 = arith.select %17, %18, %12 : vector<64x128xi1>, vector<64x128xf32>
    %c63_i32_7 = arith.constant 63 : i32
    %20 = tpu.dynamic_rotate %19 by %c63_i32_7 dim 0 : vector<64x128xf32>, i32 -> vector<64x128xf32>
    %c1_i32 = arith.constant 1 : i32
    %21 = tpu.dynamic_rotate %19 by %c1_i32 dim 0 : vector<64x128xf32>, i32 -> vector<64x128xf32>
    %c1_i32_8 = arith.constant 1 : i32
    %22 = vector.broadcast %c1_i32_8 : i32 to vector<64x128xi32>
    %23 = arith.andi %15, %22 : vector<64x128xi32>
    %c0_i32 = arith.constant 0 : i32
    %24 = vector.broadcast %c0_i32 : i32 to vector<64x128xi32>
    %25 = arith.cmpi ne, %23, %24 : vector<64x128xi32>
    %26 = arith.select %25, %21, %20 : vector<64x128xi1>, vector<64x128xf32>
    %c2_i32 = arith.constant 2 : i32
    %27 = vector.broadcast %c2_i32 : i32 to vector<64x128xi32>
    %28 = arith.andi %15, %27 : vector<64x128xi32>
    %c0_i32_9 = arith.constant 0 : i32
    %29 = vector.broadcast %c0_i32_9 : i32 to vector<64x128xi32>
    %30 = arith.cmpi eq, %28, %29 : vector<64x128xi32>
    %31 = arith.xori %30, %25 : vector<64x128xi1>
    %32 = arith.minimumf %19, %26 : vector<64x128xf32>
    %33 = arith.maximumf %19, %26 : vector<64x128xf32>
    %34 = arith.select %31, %32, %33 : vector<64x128xi1>, vector<64x128xf32>
    %c62_i32 = arith.constant 62 : i32
    %35 = tpu.dynamic_rotate %34 by %c62_i32 dim 0 : vector<64x128xf32>, i32 -> vector<64x128xf32>
    %c2_i32_10 = arith.constant 2 : i32
    %36 = tpu.dynamic_rotate %34 by %c2_i32_10 dim 0 : vector<64x128xf32>, i32 -> vector<64x128xf32>
    %c2_i32_11 = arith.constant 2 : i32
    %37 = vector.broadcast %c2_i32_11 : i32 to vector<64x128xi32>
    %38 = arith.andi %15, %37 : vector<64x128xi32>
    %c0_i32_12 = arith.constant 0 : i32
    %39 = vector.broadcast %c0_i32_12 : i32 to vector<64x128xi32>
    %40 = arith.cmpi ne, %38, %39 : vector<64x128xi32>
    %41 = arith.select %40, %36, %35 : vector<64x128xi1>, vector<64x128xf32>
    %c4_i32 = arith.constant 4 : i32
    %42 = vector.broadcast %c4_i32 : i32 to vector<64x128xi32>
    %43 = arith.andi %15, %42 : vector<64x128xi32>
    %c0_i32_13 = arith.constant 0 : i32
    %44 = vector.broadcast %c0_i32_13 : i32 to vector<64x128xi32>
    %45 = arith.cmpi eq, %43, %44 : vector<64x128xi32>
    %46 = arith.xori %45, %40 : vector<64x128xi1>
    %47 = arith.minimumf %34, %41 : vector<64x128xf32>
    %48 = arith.maximumf %34, %41 : vector<64x128xf32>
    %49 = arith.select %46, %47, %48 : vector<64x128xi1>, vector<64x128xf32>
    %c63_i32_14 = arith.constant 63 : i32
    %50 = tpu.dynamic_rotate %49 by %c63_i32_14 dim 0 : vector<64x128xf32>, i32 -> vector<64x128xf32>
    %c1_i32_15 = arith.constant 1 : i32
    %51 = tpu.dynamic_rotate %49 by %c1_i32_15 dim 0 : vector<64x128xf32>, i32 -> vector<64x128xf32>
    %c1_i32_16 = arith.constant 1 : i32
    %52 = vector.broadcast %c1_i32_16 : i32 to vector<64x128xi32>
    %53 = arith.andi %15, %52 : vector<64x128xi32>
    %c0_i32_17 = arith.constant 0 : i32
    %54 = vector.broadcast %c0_i32_17 : i32 to vector<64x128xi32>
    %55 = arith.cmpi ne, %53, %54 : vector<64x128xi32>
    %56 = arith.select %55, %51, %50 : vector<64x128xi1>, vector<64x128xf32>
    %c4_i32_18 = arith.constant 4 : i32
    %57 = vector.broadcast %c4_i32_18 : i32 to vector<64x128xi32>
    %58 = arith.andi %15, %57 : vector<64x128xi32>
    %c0_i32_19 = arith.constant 0 : i32
    %59 = vector.broadcast %c0_i32_19 : i32 to vector<64x128xi32>
    %60 = arith.cmpi eq, %58, %59 : vector<64x128xi32>
    %61 = arith.xori %60, %55 : vector<64x128xi1>
    %62 = arith.minimumf %49, %56 : vector<64x128xf32>
    %63 = arith.maximumf %49, %56 : vector<64x128xf32>
    %64 = arith.select %61, %62, %63 : vector<64x128xi1>, vector<64x128xf32>
    %c60_i32 = arith.constant 60 : i32
    %65 = tpu.dynamic_rotate %64 by %c60_i32 dim 0 : vector<64x128xf32>, i32 -> vector<64x128xf32>
    %c4_i32_20 = arith.constant 4 : i32
    %66 = tpu.dynamic_rotate %64 by %c4_i32_20 dim 0 : vector<64x128xf32>, i32 -> vector<64x128xf32>
    %c4_i32_21 = arith.constant 4 : i32
    %67 = vector.broadcast %c4_i32_21 : i32 to vector<64x128xi32>
    %68 = arith.andi %15, %67 : vector<64x128xi32>
    %c0_i32_22 = arith.constant 0 : i32
    %69 = vector.broadcast %c0_i32_22 : i32 to vector<64x128xi32>
    %70 = arith.cmpi ne, %68, %69 : vector<64x128xi32>
    %71 = arith.select %70, %66, %65 : vector<64x128xi1>, vector<64x128xf32>
    %c8_i32 = arith.constant 8 : i32
    %72 = vector.broadcast %c8_i32 : i32 to vector<64x128xi32>
    %73 = arith.andi %15, %72 : vector<64x128xi32>
    %c0_i32_23 = arith.constant 0 : i32
    %74 = vector.broadcast %c0_i32_23 : i32 to vector<64x128xi32>
    %75 = arith.cmpi eq, %73, %74 : vector<64x128xi32>
    %76 = arith.xori %75, %70 : vector<64x128xi1>
    %77 = arith.minimumf %64, %71 : vector<64x128xf32>
    %78 = arith.maximumf %64, %71 : vector<64x128xf32>
    %79 = arith.select %76, %77, %78 : vector<64x128xi1>, vector<64x128xf32>
    %c62_i32_24 = arith.constant 62 : i32
    %80 = tpu.dynamic_rotate %79 by %c62_i32_24 dim 0 : vector<64x128xf32>, i32 -> vector<64x128xf32>
    %c2_i32_25 = arith.constant 2 : i32
    %81 = tpu.dynamic_rotate %79 by %c2_i32_25 dim 0 : vector<64x128xf32>, i32 -> vector<64x128xf32>
    %c2_i32_26 = arith.constant 2 : i32
    %82 = vector.broadcast %c2_i32_26 : i32 to vector<64x128xi32>
    %83 = arith.andi %15, %82 : vector<64x128xi32>
    %c0_i32_27 = arith.constant 0 : i32
    %84 = vector.broadcast %c0_i32_27 : i32 to vector<64x128xi32>
    %85 = arith.cmpi ne, %83, %84 : vector<64x128xi32>
    %86 = arith.select %85, %81, %80 : vector<64x128xi1>, vector<64x128xf32>
    %c8_i32_28 = arith.constant 8 : i32
    %87 = vector.broadcast %c8_i32_28 : i32 to vector<64x128xi32>
    %88 = arith.andi %15, %87 : vector<64x128xi32>
    %c0_i32_29 = arith.constant 0 : i32
    %89 = vector.broadcast %c0_i32_29 : i32 to vector<64x128xi32>
    %90 = arith.cmpi eq, %88, %89 : vector<64x128xi32>
    %91 = arith.xori %90, %85 : vector<64x128xi1>
    %92 = arith.minimumf %79, %86 : vector<64x128xf32>
    %93 = arith.maximumf %79, %86 : vector<64x128xf32>
    %94 = arith.select %91, %92, %93 : vector<64x128xi1>, vector<64x128xf32>
    %c63_i32_30 = arith.constant 63 : i32
    %95 = tpu.dynamic_rotate %94 by %c63_i32_30 dim 0 : vector<64x128xf32>, i32 -> vector<64x128xf32>
    %c1_i32_31 = arith.constant 1 : i32
    %96 = tpu.dynamic_rotate %94 by %c1_i32_31 dim 0 : vector<64x128xf32>, i32 -> vector<64x128xf32>
    %c1_i32_32 = arith.constant 1 : i32
    %97 = vector.broadcast %c1_i32_32 : i32 to vector<64x128xi32>
    %98 = arith.andi %15, %97 : vector<64x128xi32>
    %c0_i32_33 = arith.constant 0 : i32
    %99 = vector.broadcast %c0_i32_33 : i32 to vector<64x128xi32>
    %100 = arith.cmpi ne, %98, %99 : vector<64x128xi32>
    %101 = arith.select %100, %96, %95 : vector<64x128xi1>, vector<64x128xf32>
    %c8_i32_34 = arith.constant 8 : i32
    %102 = vector.broadcast %c8_i32_34 : i32 to vector<64x128xi32>
    %103 = arith.andi %15, %102 : vector<64x128xi32>
    %c0_i32_35 = arith.constant 0 : i32
    %104 = vector.broadcast %c0_i32_35 : i32 to vector<64x128xi32>
    %105 = arith.cmpi eq, %103, %104 : vector<64x128xi32>
    %106 = arith.xori %105, %100 : vector<64x128xi1>
    %107 = arith.minimumf %94, %101 : vector<64x128xf32>
    %108 = arith.maximumf %94, %101 : vector<64x128xf32>
    %109 = arith.select %106, %107, %108 : vector<64x128xi1>, vector<64x128xf32>
    %c56_i32 = arith.constant 56 : i32
    %110 = tpu.dynamic_rotate %109 by %c56_i32 dim 0 : vector<64x128xf32>, i32 -> vector<64x128xf32>
    %c8_i32_36 = arith.constant 8 : i32
    %111 = tpu.dynamic_rotate %109 by %c8_i32_36 dim 0 : vector<64x128xf32>, i32 -> vector<64x128xf32>
    %c8_i32_37 = arith.constant 8 : i32
    %112 = vector.broadcast %c8_i32_37 : i32 to vector<64x128xi32>
    %113 = arith.andi %15, %112 : vector<64x128xi32>
    %c0_i32_38 = arith.constant 0 : i32
    %114 = vector.broadcast %c0_i32_38 : i32 to vector<64x128xi32>
    %115 = arith.cmpi ne, %113, %114 : vector<64x128xi32>
    %116 = arith.select %115, %111, %110 : vector<64x128xi1>, vector<64x128xf32>
    %cst_39 = arith.constant dense<true> : vector<64x128xi1>
    %117 = arith.xori %115, %cst_39 : vector<64x128xi1>
    %118 = arith.minimumf %109, %116 : vector<64x128xf32>
    %119 = arith.maximumf %109, %116 : vector<64x128xf32>
    %120 = arith.select %117, %118, %119 : vector<64x128xi1>, vector<64x128xf32>
    %c60_i32_40 = arith.constant 60 : i32
    %121 = tpu.dynamic_rotate %120 by %c60_i32_40 dim 0 : vector<64x128xf32>, i32 -> vector<64x128xf32>
    %c4_i32_41 = arith.constant 4 : i32
    %122 = tpu.dynamic_rotate %120 by %c4_i32_41 dim 0 : vector<64x128xf32>, i32 -> vector<64x128xf32>
    %c4_i32_42 = arith.constant 4 : i32
    %123 = vector.broadcast %c4_i32_42 : i32 to vector<64x128xi32>
    %124 = arith.andi %15, %123 : vector<64x128xi32>
    %c0_i32_43 = arith.constant 0 : i32
    %125 = vector.broadcast %c0_i32_43 : i32 to vector<64x128xi32>
    %126 = arith.cmpi ne, %124, %125 : vector<64x128xi32>
    %127 = arith.select %126, %122, %121 : vector<64x128xi1>, vector<64x128xf32>
    %cst_44 = arith.constant dense<true> : vector<64x128xi1>
    %128 = arith.xori %126, %cst_44 : vector<64x128xi1>
    %129 = arith.minimumf %120, %127 : vector<64x128xf32>
    %130 = arith.maximumf %120, %127 : vector<64x128xf32>
    %131 = arith.select %128, %129, %130 : vector<64x128xi1>, vector<64x128xf32>
    %c62_i32_45 = arith.constant 62 : i32
    %132 = tpu.dynamic_rotate %131 by %c62_i32_45 dim 0 : vector<64x128xf32>, i32 -> vector<64x128xf32>
    %c2_i32_46 = arith.constant 2 : i32
    %133 = tpu.dynamic_rotate %131 by %c2_i32_46 dim 0 : vector<64x128xf32>, i32 -> vector<64x128xf32>
    %c2_i32_47 = arith.constant 2 : i32
    %134 = vector.broadcast %c2_i32_47 : i32 to vector<64x128xi32>
    %135 = arith.andi %15, %134 : vector<64x128xi32>
    %c0_i32_48 = arith.constant 0 : i32
    %136 = vector.broadcast %c0_i32_48 : i32 to vector<64x128xi32>
    %137 = arith.cmpi ne, %135, %136 : vector<64x128xi32>
    %138 = arith.select %137, %133, %132 : vector<64x128xi1>, vector<64x128xf32>
    %cst_49 = arith.constant dense<true> : vector<64x128xi1>
    %139 = arith.xori %137, %cst_49 : vector<64x128xi1>
    %140 = arith.minimumf %131, %138 : vector<64x128xf32>
    %141 = arith.maximumf %131, %138 : vector<64x128xf32>
    %142 = arith.select %139, %140, %141 : vector<64x128xi1>, vector<64x128xf32>
    %c63_i32_50 = arith.constant 63 : i32
    %143 = tpu.dynamic_rotate %142 by %c63_i32_50 dim 0 : vector<64x128xf32>, i32 -> vector<64x128xf32>
    %c1_i32_51 = arith.constant 1 : i32
    %144 = tpu.dynamic_rotate %142 by %c1_i32_51 dim 0 : vector<64x128xf32>, i32 -> vector<64x128xf32>
    %c1_i32_52 = arith.constant 1 : i32
    %145 = vector.broadcast %c1_i32_52 : i32 to vector<64x128xi32>
    %146 = arith.andi %15, %145 : vector<64x128xi32>
    %c0_i32_53 = arith.constant 0 : i32
    %147 = vector.broadcast %c0_i32_53 : i32 to vector<64x128xi32>
    %148 = arith.cmpi ne, %146, %147 : vector<64x128xi32>
    %149 = arith.select %148, %144, %143 : vector<64x128xi1>, vector<64x128xf32>
    %cst_54 = arith.constant dense<true> : vector<64x128xi1>
    %150 = arith.xori %148, %cst_54 : vector<64x128xi1>
    %151 = arith.minimumf %142, %149 : vector<64x128xf32>
    %152 = arith.maximumf %142, %149 : vector<64x128xf32>
    %153 = arith.select %150, %151, %152 : vector<64x128xi1>, vector<64x128xf32>
    %154 = tpu.iota {dimensions = array<i32: 1>} : vector<1x128xi32>
    %c33_i32 = arith.constant 33 : i32
    %155 = vector.broadcast %c33_i32 : i32 to vector<1x128xi32>
    %156 = arith.cmpi slt, %154, %155 : vector<1x128xi32>
    %157 = vector.extract_strided_slice %153 {offsets = [7, 0], sizes = [1, 128], strides = [1, 1]} : vector<64x128xf32> to vector<1x128xf32>
    %158 = vector.extract_strided_slice %153 {offsets = [39, 0], sizes = [1, 128], strides = [1, 1]} : vector<64x128xf32> to vector<1x128xf32>
    %cst_55 = arith.constant 1.000000e+00 : f32
    %159 = vector.broadcast %cst_55 : f32 to vector<1x128xf32>
    %160 = arith.select %156, %158, %159 : vector<1x128xi1>, vector<1x128xf32>
    %161 = tpu.reciprocal %160 {approx = true} : vector<1x128xf32> -> vector<1x128xf32>
    %162 = arith.mulf %157, %161 : vector<1x128xf32>
    %cst_56 = arith.constant 0.000000e+00 : f32
    %163 = vector.broadcast %cst_56 : f32 to vector<1x128xf32>
    %164 = arith.select %156, %162, %163 : vector<1x128xi1>, vector<1x128xf32>
    %165 = vector.shape_cast %164 : vector<1x128xf32> to vector<1x1x128xf32>
    %cst_57 = arith.constant dense<0.000000e+00> : vector<1xf32>
    %166 = vector.multi_reduction <add>, %165, %cst_57 [1, 2] : vector<1x1x128xf32> to vector<1xf32>
    %167 = vector.shape_cast %166 : vector<1xf32> to vector<1x1x1xf32>
    %168 = vector.extract %167[0, 0, 0] : f32 from vector<1x1x1xf32>
    %cst_58 = arith.constant 0.000000e+00 : f32
    %169 = arith.addf %cst_58, %168 : f32
    %170 = vector.extract_strided_slice %153 {offsets = [23, 0], sizes = [1, 128], strides = [1, 1]} : vector<64x128xf32> to vector<1x128xf32>
    %171 = vector.extract_strided_slice %153 {offsets = [55, 0], sizes = [1, 128], strides = [1, 1]} : vector<64x128xf32> to vector<1x128xf32>
    %cst_59 = arith.constant 1.000000e+00 : f32
    %172 = vector.broadcast %cst_59 : f32 to vector<1x128xf32>
    %173 = arith.select %156, %171, %172 : vector<1x128xi1>, vector<1x128xf32>
    %174 = tpu.reciprocal %173 {approx = true} : vector<1x128xf32> -> vector<1x128xf32>
    %175 = arith.mulf %170, %174 : vector<1x128xf32>
    %cst_60 = arith.constant 0.000000e+00 : f32
    %176 = vector.broadcast %cst_60 : f32 to vector<1x128xf32>
    %177 = arith.select %156, %175, %176 : vector<1x128xi1>, vector<1x128xf32>
    %178 = vector.shape_cast %177 : vector<1x128xf32> to vector<1x1x128xf32>
    %cst_61 = arith.constant dense<0.000000e+00> : vector<1xf32>
    %179 = vector.multi_reduction <add>, %178, %cst_61 [1, 2] : vector<1x1x128xf32> to vector<1xf32>
    %180 = vector.shape_cast %179 : vector<1xf32> to vector<1x1x1xf32>
    %181 = vector.extract %180[0, 0, 0] : f32 from vector<1x1x1xf32>
    %182 = arith.addf %169, %181 : f32
    %cst_62 = arith.constant 6.600000e+01 : f32
    %183 = arith.divf %182, %cst_62 : f32
    %184 = arith.mulf %2, %2 : vector<32x32xf32>
    %185 = vector.shape_cast %184 : vector<32x32xf32> to vector<1x32x32xf32>
    %cst_63 = arith.constant dense<0.000000e+00> : vector<1xf32>
    %186 = vector.multi_reduction <add>, %185, %cst_63 [1, 2] : vector<1x32x32xf32> to vector<1xf32>
    %187 = vector.shape_cast %186 : vector<1xf32> to vector<1x1x1xf32>
    %188 = vector.extract %187[0, 0, 0] : f32 from vector<1x1x1xf32>
    %cst_64 = arith.constant 1.024000e+03 : f32
    %189 = arith.divf %188, %cst_64 : f32
    %cst_65 = arith.constant 5.000000e-01 : f32
    %190 = arith.mulf %cst_65, %183 : f32
    %cst_66 = arith.constant 5.000000e-01 : f32
    %191 = arith.mulf %cst_66, %189 : f32
    %192 = arith.addf %190, %191 : f32
    %c0_67 = arith.constant 0 : index
    %c0_68 = arith.constant 0 : index
    %193 = memref.load %arg3[%c0_67, %c0_68] : memref<1x1xf32, #tpu.memory_space<smem>>
    memref.store %192, %arg3[%c0_67, %c0_68] : memref<1x1xf32, #tpu.memory_space<smem>>
    return
  }
}

</mosaic_0001>

<llo_original>
// kernel: composite_psd_loss.1
$region0: #{composite_psd_loss.1}
  #allocation0 [shape = 'u32[]', space=smem, size = 0x4, offset = 0x4, fixed_abs, tag = 'smem constant byte address 0x4 - core index']
  #allocation1 [shape = 'u32[144,128]{1,0:T(1,128)}', space=vmem, size = 0x12000, scoped, tag = 'internal scratch']
  %s0 = inlined_call_operand.vmem [shape: f32[32,32], index: 0, kind: input, shape index: {}]
  %s1 = inlined_call_operand.vmem [shape: f32[32,32], index: 1, kind: input, shape index: {}]
  %s2 = inlined_call_operand.vmem [shape: f32[32,256], index: 2, kind: input, shape index: {}]
  %s3 = inlined_call_operand.hbm [shape: f32[1,1], index: 3, kind: output, shape index: {}]
  %s4 = sld [smem:[#allocation0]]
  $region22: #{composite_psd_loss.1} parent=0
    _
  %s6 = ssub.s32 1, %s4
  %s7 = scalar_select 0, %s6, %s4
  $region1: #{composite_psd_loss.1} parent=0
    #allocation2 [shape = 'u8[512]{0}', space=smem, size = 0x200, scoped, tag = 'output window, operand 0, single buffered']
    #allocation3 [shape = 's32[1]{0}', space=sflag, size = 0x4, scoped, tag = 'scoped memory for composite_psd_loss.1']
    %8 = vsyncpa [#allocation3], 0
    // Predicated region
    $region2: #{composite_psd_loss.1} parent=1 // pred_check
      _
    $region3: #{composite_psd_loss.1} parent=1 // pred_check_branch
      %10 = sbr.rel (0) target = $region5
    $region4: #{composite_psd_loss.1} parent=1 // pred_region
      _
    $region5: #{composite_psd_loss.1} parent=1 // pred_fallthru
      _
    // Predicated region
    $region6: #{composite_psd_loss.1} parent=1 // pred_check
      _
    $region7: #{composite_psd_loss.1} parent=1 // pred_check_branch
      %12 = sbr.rel (0) target = $region9
    $region8: #{composite_psd_loss.1} parent=1 // pred_region
      _
    $region9: #{composite_psd_loss.1} parent=1 // pred_fallthru
      _
    // Predicated region
    $region10: #{composite_psd_loss.1} parent=1 // pred_check
      _
    $region11: #{composite_psd_loss.1} parent=1 // pred_check_branch
      %14 = sbr.rel (0) target = $region13
    $region12: #{composite_psd_loss.1} parent=1 // pred_region
      _
    $region13: #{composite_psd_loss.1} parent=1 // pred_fallthru
      _
    %v15 = vld [vmem:[%s1] sm:$0xff]
    %v16 = vld [vmem:[%s1 + $0x8] sm:$0xff]
    %v17 = vld [vmem:[%s1 + $0x10] sm:$0xff]
    %v18 = vld [vmem:[%s1 + $0x18] sm:$0xff]
    %v19 = vld [vmem:[%s0] sm:$0xff]
    %v20 = vld [vmem:[%s0 + $0x8] sm:$0xff]
    %v21 = vld [vmem:[%s0 + $0x10] sm:$0xff]
    %v22 = vld [vmem:[%s0 + $0x18] sm:$0xff]
    %v23 = vsub.f32 %v15, %v19
    %v24 = vsub.f32 %v16, %v20
    %v25 = vsub.f32 %v17, %v21
    %v26 = vsub.f32 %v18, %v22
    %v27 = vld [vmem:[%s2] sm:$0xff]
    %v28 = vld [vmem:[%s2 + $0x8] sm:$0xff]
    %v29 = vld [vmem:[%s2 + $0x10] sm:$0xff]
    %v30 = vld [vmem:[%s2 + $0x18] sm:$0xff]
    %v31 = vld [vmem:[%s2 + $0x20] sm:$0xff]
    %v32 = vld [vmem:[%s2 + $0x28] sm:$0xff]
    %v33 = vld [vmem:[%s2 + $0x30] sm:$0xff]
    %v34 = vld [vmem:[%s2 + $0x38] sm:$0xff]
    %vm35 = vcmask 261120
    %v37 = vsel %vm35, %v23, 0
    %v40 = vsel %vm35, %v24, 0
    %v43 = vsel %vm35, %v25, 0
    %v46 = vsel %vm35, %v26, 0
    %v49 = vsel %vm35, %v15, 0
    %v52 = vsel %vm35, %v16, 0
    %v55 = vsel %vm35, %v17, 0
    %v58 = vsel %vm35, %v18, 0
    %60 = vmatprep.subr.mxu0 %v28
    %61 = vmatpush1.msra.mxu0 %v27
    %62 = vmatprep.subr.mxu0 %v30
    %63 = vmatpush1.msra.mxu0 %v29
    %64 = vmatprep.subr.mxu0 %v32
    %65 = vmatpush1.msra.mxu0 %v31
    %66 = vmatprep.subr.mxu0 %v34
    %67 = vmatpush1.msra.mxu0 %v33
    %68 = vmatprep.subr.mxu0 0.0
    %69 = vmatpush1.msra.mxu0 0.0
    %70 = vmatprep.subr.mxu0 0.0
    %71 = vmatpush1.msra.mxu0 0.0
    %72 = vmatprep.subr.mxu0 0.0
    %73 = vmatpush1.msra.mxu0 0.0
    %74 = vmatprep.subr.mxu0 0.0
    %75 = vmatpush1.msra.mxu0 0.0
    %76 = vmatprep.subr.mxu0 0.0
    %77 = vmatpush1.msra.mxu0 0.0
    %78 = vmatprep.subr.mxu0 0.0
    %79 = vmatpush1.msra.mxu0 0.0
    %80 = vmatprep.subr.mxu0 0.0
    %81 = vmatpush1.msra.mxu0 0.0
    %82 = vmatprep.subr.mxu0 0.0
    %83 = vmatpush1.msra.mxu0 0.0
    %84 = vmatprep.subr.mxu0 0.0
    %85 = vmatpush1.msra.mxu0 0.0
    %86 = vmatprep.subr.mxu0 0.0
    %87 = vmatpush1.msra.mxu0 0.0
    %88 = vmatprep.subr.mxu0 0.0
    %89 = vmatpush1.msra.mxu0 0.0
    %90 = vmatprep.subr.mxu0 0.0
    %91 = vmatpush1.msra.mxu0 0.0
    %92 = vmatprep.subr.mxu0 0.0
    %93 = vmatpush1.msra.mxu0 0.0
    %94 = vmatprep.subr.mxu0 0.0
    %95 = vmatpush1.msra.mxu0 0.0
    %96 = vmatprep.subr.mxu0 0.0
    %97 = vmatpush1.msra.mxu0 0.0
    %98 = vmatprep.subr.mxu0 0.0
    %99 = vmatpush1.msra.mxu0 0.0
    %100 = vmatprep.subr.mxu0 0.0
    %101 = vmatpush1.msra.mxu0 0.0
    %102 = vmatprep.subr.mxu0 0.0
    %103 = vmatpush1.msra.mxu0 0.0
    %104 = vmatprep.subr.mxu0 0.0
    %105 = vmatpush1.msra.mxu0 0.0
    %106 = vmatprep.subr.mxu0 0.0
    %107 = vmatpush1.msra.mxu0 0.0
    %108 = vmatprep.subr.mxu0 0.0
    %109 = vmatpush1.msra.mxu0 0.0
    %110 = vmatprep.subr.mxu0 0.0
    %111 = vmatpush1.msra.mxu0 0.0
    %112 = vmatprep.subr.mxu0 0.0
    %113 = vmatpush1.msra.mxu0 0.0
    %114 = vmatprep.subr.mxu0 0.0
    %115 = vmatpush1.msra.mxu0 0.0
    %116 = vmatprep.subr.mxu0 0.0
    %117 = vmatpush1.msra.mxu0 0.0
    %118 = vmatprep.subr.mxu0 0.0
    %119 = vmatpush1.msra.mxu0 0.0
    %120 = vmatprep.subr.mxu0 0.0
    %121 = vmatpush1.msra.mxu0 0.0
    %122 = vmatprep.subr.mxu0 0.0
    %123 = vmatpush1.msra.mxu0 0.0
    %124 = vmatprep.mubr.f32.mxu0 0.0
    %125 = vmatmul.mubr.f32.gmra.mrb[0].mxu0 %v37
    %v126 = vpop.f32.mrb[0].mxu0
    %v127 = vadd.f32 0.0, %v126
    %v128 = vpop.f32.mrb[0].mxu0
    %v129 = vadd.f32 0.0, %v128
    %130 = vmatprep.mubr.f32.mxu0 0.0
    %131 = vmatmul.mubr.f32.gmra.mrb[0].mxu0 %v40
    %v132 = vpop.f32.mrb[0].mxu0
    %v133 = vadd.f32 0.0, %v132
    %v134 = vpop.f32.mrb[0].mxu0
    %v135 = vadd.f32 0.0, %v134
    %136 = vmatprep.mubr.f32.mxu0 0.0
    %137 = vmatmul.mubr.f32.gmra.mrb[0].mxu0 %v43
    %v138 = vpop.f32.mrb[0].mxu0
    %v139 = vadd.f32 0.0, %v138
    %v140 = vpop.f32.mrb[0].mxu0
    %v141 = vadd.f32 0.0, %v140
    %142 = vmatprep.mubr.f32.mxu0 0.0
    %143 = vmatmul.mubr.f32.gmra.mrb[0].mxu0 %v46
    %v144 = vpop.f32.mrb[0].mxu0
    %v145 = vadd.f32 0.0, %v144
    %v146 = vpop.f32.mrb[0].mxu0
    %v147 = vadd.f32 0.0, %v146
    %148 = vmatprep.mubr.f32.mxu0 0.0
    %149 = vmatmul.mubr.f32.gmra.mrb[0].mxu0 %v49
    %v150 = vpop.f32.mrb[0].mxu0
    %v151 = vadd.f32 0.0, %v150
    %v152 = vpop.f32.mrb[0].mxu0
    %v153 = vadd.f32 0.0, %v152
    %154 = vmatprep.mubr.f32.mxu0 0.0
    %155 = vmatmul.mubr.f32.gmra.mrb[0].mxu0 %v52
    %v156 = vpop.f32.mrb[0].mxu0
    %v157 = vadd.f32 0.0, %v156
    %v158 = vpop.f32.mrb[0].mxu0
    %v159 = vadd.f32 0.0, %v158
    %160 = vmatprep.mubr.f32.mxu0 0.0
    %161 = vmatmul.mubr.f32.gmra.mrb[0].mxu0 %v55
    %v162 = vpop.f32.mrb[0].mxu0
    %v163 = vadd.f32 0.0, %v162
    %v164 = vpop.f32.mrb[0].mxu0
    %v165 = vadd.f32 0.0, %v164
    %166 = vmatprep.mubr.f32.mxu0 0.0
    %167 = vmatmul.mubr.f32.gmra.mrb[0].mxu0 %v58
    %v168 = vpop.f32.mrb[0].mxu0
    %v169 = vadd.f32 0.0, %v168
    %v170 = vpop.f32.mrb[0].mxu0
    %v171 = vadd.f32 0.0, %v170
    %172 = vdwg.mxu0
    %v173 = vrot.slane %v129, 1
    %v174 = vrot.slane %v135, 1
    %v175 = vrot.slane %v141, 1
    %v176 = vrot.slane %v147, 1
    %v177 = vrot.slane %v153, 1
    %v178 = vrot.slane %v159, 1
    %v179 = vrot.slane %v165, 1
    %v180 = vrot.slane %v171, 1
    %v181 = vlaneseq
    %v182 = vshrl.u32 %v181, 7
    %vm183 = vcmp.lt.s32.totalorder %v182, 7
    %v184 = vsel %vm183, %v179, %v180
    %v185 = vsel %vm183, %v178, %v179
    %v186 = vsel %vm183, %v177, %v178
    %v187 = vsel %vm183, %v176, %v177
    %v188 = vsel %vm183, %v175, %v176
    %v189 = vsel %vm183, %v174, %v175
    %v190 = vsel %vm183, %v173, %v174
    %v191 = vsel %vm183, %v180, %v173
    %v192 = vadd.f32 %v127, %v190
    %v193 = vadd.f32 %v133, %v189
    %v194 = vadd.f32 %v139, %v188
    %v195 = vadd.f32 %v145, %v187
    %v196 = vadd.f32 %v151, %v186
    %v197 = vadd.f32 %v157, %v185
    %v198 = vadd.f32 %v163, %v184
    %v199 = vadd.f32 %v169, %v191
    %v200 = vmul.f32 %v192, %v192
    %v201 = vmul.f32 %v193, %v193
    %v202 = vmul.f32 %v194, %v194
    %v203 = vmul.f32 %v195, %v195
    %v204 = vmul.f32 %v196, %v196
    %v205 = vmul.f32 %v197, %v197
    %v206 = vmul.f32 %v198, %v198
    %v207 = vmul.f32 %v199, %v199
    %208 = vrot.lane.b32.xlu0 %v200, 64
    %v209 = vpop.permute.xlu0 %208
    %210 = vrot.lane.b32.xlu0 %v201, 64
    %v211 = vpop.permute.xlu0 %210
    %212 = vrot.lane.b32.xlu0 %v202, 64
    %v213 = vpop.permute.xlu0 %212
    %214 = vrot.lane.b32.xlu0 %v203, 64
    %v215 = vpop.permute.xlu0 %214
    %216 = vrot.lane.b32.xlu0 %v204, 64
    %v217 = vpop.permute.xlu0 %216
    %218 = vrot.lane.b32.xlu0 %v205, 64
    %v219 = vpop.permute.xlu0 %218
    %220 = vrot.lane.b32.xlu0 %v206, 64
    %v221 = vpop.permute.xlu0 %220
    %222 = vrot.lane.b32.xlu0 %v207, 64
    %v223 = vpop.permute.xlu0 %222
    %v224 = vadd.f32 %v200, %v209
    %v225 = vadd.f32 %v201, %v211
    %v226 = vadd.f32 %v202, %v213
    %v227 = vadd.f32 %v203, %v215
    %v228 = vadd.f32 %v204, %v217
    %v229 = vadd.f32 %v205, %v219
    %v230 = vadd.f32 %v206, %v221
    %v231 = vadd.f32 %v207, %v223
    %v232 = vadd.s32 %v182, 8
    %v233 = vadd.s32 %v182, 16
    %v234 = vadd.s32 %v182, 24
    %v235 = vadd.s32 %v182, 32
    %v236 = vadd.s32 %v182, 40
    %v237 = vadd.s32 %v182, 48
    %v238 = vadd.s32 %v182, 56
    %v239 = vand.u32 %v182, 15
    %v240 = vand.u32 %v232, 15
    %v241 = vand.u32 %v233, 15
    %v242 = vand.u32 %v234, 15
    %v243 = vand.u32 %v235, 15
    %v244 = vand.u32 %v236, 15
    %v245 = vand.u32 %v237, 15
    %v246 = vand.u32 %v238, 15
    %vm247 = vcmp.eq.s32.totalorder %v239, 15
    %vm248 = vcmp.eq.s32.totalorder %v240, 15
    %vm249 = vcmp.eq.s32.totalorder %v241, 15
    %vm250 = vcmp.eq.s32.totalorder %v242, 15
    %vm251 = vcmp.eq.s32.totalorder %v243, 15
    %vm252 = vcmp.eq.s32.totalorder %v244, 15
    %vm253 = vcmp.eq.s32.totalorder %v245, 15
    %vm254 = vcmp.eq.s32.totalorder %v246, 15
    %v255 = vsel %vm247, inf, %v224
    %v256 = vsel %vm248, inf, %v225
    %v257 = vsel %vm249, inf, %v226
    %v258 = vsel %vm250, inf, %v227
    %v259 = vsel %vm251, inf, %v228
    %v260 = vsel %vm252, inf, %v229
    %v261 = vsel %vm253, inf, %v230
    %v262 = vsel %vm254, inf, %v231
    %v263 = vrot.slane %v255, 1
    %v264 = vrot.slane %v256, 1
    %v265 = vrot.slane %v257, 1
    %v266 = vrot.slane %v258, 1
    %v267 = vrot.slane %v259, 1
    %v268 = vrot.slane %v260, 1
    %v269 = vrot.slane %v261, 1
    %v270 = vrot.slane %v262, 1
    %v271 = vsel %vm183, %v269, %v270
    %v272 = vsel %vm183, %v268, %v269
    %v273 = vsel %vm183, %v267, %v268
    %v274 = vsel %vm183, %v266, %v267
    %v275 = vsel %vm183, %v265, %v266
    %v276 = vsel %vm183, %v264, %v265
    %v277 = vsel %vm183, %v263, %v264
    %v278 = vsel %vm183, %v270, %v263
    %v279 = vrot.slane %v255, 7
    %v280 = vrot.slane %v256, 7
    %v281 = vrot.slane %v257, 7
    %v282 = vrot.slane %v258, 7
    %v283 = vrot.slane %v259, 7
    %v284 = vrot.slane %v260, 7
    %v285 = vrot.slane %v261, 7
    %v286 = vrot.slane %v262, 7
    %vm287 = vcmp.lt.s32.totalorder %v182, 1
    %v288 = vsel %vm287, %v285, %v286
    %v289 = vsel %vm287, %v284, %v285
    %v290 = vsel %vm287, %v283, %v284
    %v291 = vsel %vm287, %v282, %v283
    %v292 = vsel %vm287, %v281, %v282
    %v293 = vsel %vm287, %v280, %v281
    %v294 = vsel %vm287, %v279, %v280
    %v295 = vsel %vm287, %v286, %v279
    %v296 = vand.u32 %v239, 1
    %v297 = vand.u32 %v240, 1
    %v298 = vand.u32 %v241, 1
    %v299 = vand.u32 %v242, 1
    %v300 = vand.u32 %v243, 1
    %v301 = vand.u32 %v244, 1
    %v302 = vand.u32 %v245, 1
    %v303 = vand.u32 %v246, 1
    %vm304 = vcmp.ne.s32.totalorder %v296, 0
    %vm305 = vcmp.ne.s32.totalorder %v297, 0
    %vm306 = vcmp.ne.s32.totalorder %v298, 0
    %vm307 = vcmp.ne.s32.totalorder %v299, 0
    %vm308 = vcmp.ne.s32.totalorder %v300, 0
    %vm309 = vcmp.ne.s32.totalorder %v301, 0
    %vm310 = vcmp.ne.s32.totalorder %v302, 0
    %vm311 = vcmp.ne.s32.totalorder %v303, 0
    %v312 = vsel %vm304, %v295, %v277
    %v313 = vsel %vm305, %v294, %v276
    %v314 = vsel %vm306, %v293, %v275
    %v315 = vsel %vm307, %v292, %v274
    %v316 = vsel %vm308, %v291, %v273
    %v317 = vsel %vm309, %v290, %v272
    %v318 = vsel %vm310, %v289, %v271
    %v319 = vsel %vm311, %v288, %v278
    %v320 = vand.u32 %v239, 2
    %v321 = vand.u32 %v240, 2
    %v322 = vand.u32 %v241, 2
    %v323 = vand.u32 %v242, 2
    %v324 = vand.u32 %v243, 2
    %v325 = vand.u32 %v244, 2
    %v326 = vand.u32 %v245, 2
    %v327 = vand.u32 %v246, 2
    %vm328 = vcmp.eq.s32.totalorder %v320, 0
    %vm329 = vcmp.eq.s32.totalorder %v321, 0
    %vm330 = vcmp.eq.s32.totalorder %v322, 0
    %vm331 = vcmp.eq.s32.totalorder %v323, 0
    %vm332 = vcmp.eq.s32.totalorder %v324, 0
    %vm333 = vcmp.eq.s32.totalorder %v325, 0
    %vm334 = vcmp.eq.s32.totalorder %v326, 0
    %vm335 = vcmp.eq.s32.totalorder %v327, 0
    %vm336 = vmxor %vm328, %vm304
    %vm337 = vmxor %vm329, %vm305
    %vm338 = vmxor %vm330, %vm306
    %vm339 = vmxor %vm331, %vm307
    %vm340 = vmxor %vm332, %vm308
    %vm341 = vmxor %vm333, %vm309
    %vm342 = vmxor %vm334, %vm310
    %vm343 = vmxor %vm335, %vm311
    %v344 = vmin.f32 %v255, %v312
    %v345 = vmin.f32 %v256, %v313
    %v346 = vmin.f32 %v257, %v314
    %v347 = vmin.f32 %v258, %v315
    %v348 = vmin.f32 %v259, %v316
    %v349 = vmin.f32 %v260, %v317
    %v350 = vmin.f32 %v261, %v318
    %v351 = vmin.f32 %v262, %v319
    %v352 = vmax.f32 %v255, %v312
    %v353 = vmax.f32 %v256, %v313
    %v354 = vmax.f32 %v257, %v314
    %v355 = vmax.f32 %v258, %v315
    %v356 = vmax.f32 %v259, %v316
    %v357 = vmax.f32 %v260, %v317
    %v358 = vmax.f32 %v261, %v318
    %v359 = vmax.f32 %v262, %v319
    %v360 = vsel %vm336, %v344, %v352
    %v361 = vsel %vm337, %v345, %v353
    %v362 = vsel %vm338, %v346, %v354
    %v363 = vsel %vm339, %v347, %v355
    %v364 = vsel %vm340, %v348, %v356
    %v365 = vsel %vm341, %v349, %v357
    %v366 = vsel %vm342, %v350, %v358
    %v367 = vsel %vm343, %v351, %v359
    %v368 = vrot.slane %v360, 2
    %v369 = vrot.slane %v361, 2
    %v370 = vrot.slane %v362, 2
    %v371 = vrot.slane %v363, 2
    %v372 = vrot.slane %v364, 2
    %v373 = vrot.slane %v365, 2
    %v374 = vrot.slane %v366, 2
    %v375 = vrot.slane %v367, 2
    %vm376 = vcmp.lt.s32.totalorder %v182, 6
    %v377 = vsel %vm376, %v374, %v375
    %v378 = vsel %vm376, %v373, %v374
    %v379 = vsel %vm376, %v372, %v373
    %v380 = vsel %vm376, %v371, %v372
    %v381 = vsel %vm376, %v370, %v371
    %v382 = vsel %vm376, %v369, %v370
    %v383 = vsel %vm376, %v368, %v369
    %v384 = vsel %vm376, %v375, %v368
    %v385 = vrot.slane %v360, 6
    %v386 = vrot.slane %v361, 6
    %v387 = vrot.slane %v362, 6
    %v388 = vrot.slane %v363, 6
    %v389 = vrot.slane %v364, 6
    %v390 = vrot.slane %v365, 6
    %v391 = vrot.slane %v366, 6
    %v392 = vrot.slane %v367, 6
    %vm393 = vcmp.lt.s32.totalorder %v182, 2
    %v394 = vsel %vm393, %v391, %v392
    %v395 = vsel %vm393, %v390, %v391
    %v396 = vsel %vm393, %v389, %v390
    %v397 = vsel %vm393, %v388, %v389
    %v398 = vsel %vm393, %v387, %v388
    %v399 = vsel %vm393, %v386, %v387
    %v400 = vsel %vm393, %v385, %v386
    %v401 = vsel %vm393, %v392, %v385
    %vm402 = vcmp.ne.s32.totalorder %v320, 0
    %vm403 = vcmp.ne.s32.totalorder %v321, 0
    %vm404 = vcmp.ne.s32.totalorder %v322, 0
    %vm405 = vcmp.ne.s32.totalorder %v323, 0
    %vm406 = vcmp.ne.s32.totalorder %v324, 0
    %vm407 = vcmp.ne.s32.totalorder %v325, 0
    %vm408 = vcmp.ne.s32.totalorder %v326, 0
    %vm409 = vcmp.ne.s32.totalorder %v327, 0
    %v410 = vsel %vm402, %v401, %v383
    %v411 = vsel %vm403, %v400, %v382
    %v412 = vsel %vm404, %v399, %v381
    %v413 = vsel %vm405, %v398, %v380
    %v414 = vsel %vm406, %v397, %v379
    %v415 = vsel %vm407, %v396, %v378
    %v416 = vsel %vm408, %v395, %v377
    %v417 = vsel %vm409, %v394, %v384
    %v418 = vand.u32 %v239, 4
    %v419 = vand.u32 %v240, 4
    %v420 = vand.u32 %v241, 4
    %v421 = vand.u32 %v242, 4
    %v422 = vand.u32 %v243, 4
    %v423 = vand.u32 %v244, 4
    %v424 = vand.u32 %v245, 4
    %v425 = vand.u32 %v246, 4
    %vm426 = vcmp.eq.s32.totalorder %v418, 0
    %vm427 = vcmp.eq.s32.totalorder %v419, 0
    %vm428 = vcmp.eq.s32.totalorder %v420, 0
    %vm429 = vcmp.eq.s32.totalorder %v421, 0
    %vm430 = vcmp.eq.s32.totalorder %v422, 0
    %vm431 = vcmp.eq.s32.totalorder %v423, 0
    %vm432 = vcmp.eq.s32.totalorder %v424, 0
    %vm433 = vcmp.eq.s32.totalorder %v425, 0
    %vm434 = vmxor %vm426, %vm402
    %vm435 = vmxor %vm427, %vm403
    %vm436 = vmxor %vm428, %vm404
    %vm437 = vmxor %vm429, %vm405
    %vm438 = vmxor %vm430, %vm406
    %vm439 = vmxor %vm431, %vm407
    %vm440 = vmxor %vm432, %vm408
    %vm441 = vmxor %vm433, %vm409
    %v442 = vmin.f32 %v360, %v410
    %v443 = vmin.f32 %v361, %v411
    %v444 = vmin.f32 %v362, %v412
    %v445 = vmin.f32 %v363, %v413
    %v446 = vmin.f32 %v364, %v414
    %v447 = vmin.f32 %v365, %v415
    %v448 = vmin.f32 %v366, %v416
    %v449 = vmin.f32 %v367, %v417
    %v450 = vmax.f32 %v360, %v410
    %v451 = vmax.f32 %v361, %v411
    %v452 = vmax.f32 %v362, %v412
    %v453 = vmax.f32 %v363, %v413
    %v454 = vmax.f32 %v364, %v414
    %v455 = vmax.f32 %v365, %v415
    %v456 = vmax.f32 %v366, %v416
    %v457 = vmax.f32 %v367, %v417
    %v458 = vsel %vm434, %v442, %v450
    %v459 = vsel %vm435, %v443, %v451
    %v460 = vsel %vm436, %v444, %v452
    %v461 = vsel %vm437, %v445, %v453
    %v462 = vsel %vm438, %v446, %v454
    %v463 = vsel %vm439, %v447, %v455
    %v464 = vsel %vm440, %v448, %v456
    %v465 = vsel %vm441, %v449, %v457
    %v466 = vrot.slane %v458, 1
    %v467 = vrot.slane %v459, 1
    %v468 = vrot.slane %v460, 1
    %v469 = vrot.slane %v461, 1
    %v470 = vrot.slane %v462, 1
    %v471 = vrot.slane %v463, 1
    %v472 = vrot.slane %v464, 1
    %v473 = vrot.slane %v465, 1
    %v474 = vsel %vm183, %v472, %v473
    %v475 = vsel %vm183, %v471, %v472
    %v476 = vsel %vm183, %v470, %v471
    %v477 = vsel %vm183, %v469, %v470
    %v478 = vsel %vm183, %v468, %v469
    %v479 = vsel %vm183, %v467, %v468
    %v480 = vsel %vm183, %v466, %v467
    %v481 = vsel %vm183, %v473, %v466
    %v482 = vrot.slane %v458, 7
    %v483 = vrot.slane %v459, 7
    %v484 = vrot.slane %v460, 7
    %v485 = vrot.slane %v461, 7
    %v486 = vrot.slane %v462, 7
    %v487 = vrot.slane %v463, 7
    %v488 = vrot.slane %v464, 7
    %v489 = vrot.slane %v465, 7
    %v490 = vsel %vm287, %v488, %v489
    %v491 = vsel %vm287, %v487, %v488
    %v492 = vsel %vm287, %v486, %v487
    %v493 = vsel %vm287, %v485, %v486
    %v494 = vsel %vm287, %v484, %v485
    %v495 = vsel %vm287, %v483, %v484
    %v496 = vsel %vm287, %v482, %v483
    %v497 = vsel %vm287, %v489, %v482
    %v498 = vsel %vm304, %v497, %v480
    %v499 = vsel %vm305, %v496, %v479
    %v500 = vsel %vm306, %v495, %v478
    %v501 = vsel %vm307, %v494, %v477
    %v502 = vsel %vm308, %v493, %v476
    %v503 = vsel %vm309, %v492, %v475
    %v504 = vsel %vm310, %v491, %v474
    %v505 = vsel %vm311, %v490, %v481
    %vm506 = vmxor %vm426, %vm304
    %vm507 = vmxor %vm427, %vm305
    %vm508 = vmxor %vm428, %vm306
    %vm509 = vmxor %vm429, %vm307
    %vm510 = vmxor %vm430, %vm308
    %vm511 = vmxor %vm431, %vm309
    %vm512 = vmxor %vm432, %vm310
    %vm513 = vmxor %vm433, %vm311
    %v514 = vmin.f32 %v458, %v498
    %v515 = vmin.f32 %v459, %v499
    %v516 = vmin.f32 %v460, %v500
    %v517 = vmin.f32 %v461, %v501
    %v518 = vmin.f32 %v462, %v502
    %v519 = vmin.f32 %v463, %v503
    %v520 = vmin.f32 %v464, %v504
    %v521 = vmin.f32 %v465, %v505
    %v522 = vmax.f32 %v458, %v498
    %v523 = vmax.f32 %v459, %v499
    %v524 = vmax.f32 %v460, %v500
    %v525 = vmax.f32 %v461, %v501
    %v526 = vmax.f32 %v462, %v502
    %v527 = vmax.f32 %v463, %v503
    %v528 = vmax.f32 %v464, %v504
    %v529 = vmax.f32 %v465, %v505
    %v530 = vsel %vm506, %v514, %v522
    %v531 = vsel %vm507, %v515, %v523
    %v532 = vsel %vm508, %v516, %v524
    %v533 = vsel %vm509, %v517, %v525
    %v534 = vsel %vm510, %v518, %v526
    %v535 = vsel %vm511, %v519, %v527
    %v536 = vsel %vm512, %v520, %v528
    %v537 = vsel %vm513, %v521, %v529
    %v538 = vrot.slane %v530, 4
    %v539 = vrot.slane %v531, 4
    %v540 = vrot.slane %v532, 4
    %v541 = vrot.slane %v533, 4
    %v542 = vrot.slane %v534, 4
    %v543 = vrot.slane %v535, 4
    %v544 = vrot.slane %v536, 4
    %v545 = vrot.slane %v537, 4
    %vm546 = vcmp.lt.s32.totalorder %v182, 4
    %v547 = vsel %vm546, %v544, %v545
    %v548 = vsel %vm546, %v543, %v544
    %v549 = vsel %vm546, %v542, %v543
    %v550 = vsel %vm546, %v541, %v542
    %v551 = vsel %vm546, %v540, %v541
    %v552 = vsel %vm546, %v539, %v540
    %v553 = vsel %vm546, %v538, %v539
    %v554 = vsel %vm546, %v545, %v538
    %vm555 = vcmp.ne.s32.totalorder %v418, 0
    %vm556 = vcmp.ne.s32.totalorder %v419, 0
    %vm557 = vcmp.ne.s32.totalorder %v420, 0
    %vm558 = vcmp.ne.s32.totalorder %v421, 0
    %vm559 = vcmp.ne.s32.totalorder %v422, 0
    %vm560 = vcmp.ne.s32.totalorder %v423, 0
    %vm561 = vcmp.ne.s32.totalorder %v424, 0
    %vm562 = vcmp.ne.s32.totalorder %v425, 0
    %v563 = vsel %vm555, %v554, %v553
    %v564 = vsel %vm556, %v553, %v552
    %v565 = vsel %vm557, %v552, %v551
    %v566 = vsel %vm558, %v551, %v550
    %v567 = vsel %vm559, %v550, %v549
    %v568 = vsel %vm560, %v549, %v548
    %v569 = vsel %vm561, %v548, %v547
    %v570 = vsel %vm562, %v547, %v554
    %v571 = vand.u32 %v239, 8
    %v572 = vand.u32 %v240, 8
    %v573 = vand.u32 %v241, 8
    %v574 = vand.u32 %v242, 8
    %v575 = vand.u32 %v243, 8
    %v576 = vand.u32 %v244, 8
    %v577 = vand.u32 %v245, 8
    %v578 = vand.u32 %v246, 8
    %vm579 = vcmp.eq.s32.totalorder %v571, 0
    %vm580 = vcmp.eq.s32.totalorder %v572, 0
    %vm581 = vcmp.eq.s32.totalorder %v573, 0
    %vm582 = vcmp.eq.s32.totalorder %v574, 0
    %vm583 = vcmp.eq.s32.totalorder %v575, 0
    %vm584 = vcmp.eq.s32.totalorder %v576, 0
    %vm585 = vcmp.eq.s32.totalorder %v577, 0
    %vm586 = vcmp.eq.s32.totalorder %v578, 0
    %vm587 = vmxor %vm579, %vm555
    %vm588 = vmxor %vm580, %vm556
    %vm589 = vmxor %vm581, %vm557
    %vm590 = vmxor %vm582, %vm558
    %vm591 = vmxor %vm583, %vm559
    %vm592 = vmxor %vm584, %vm560
    %vm593 = vmxor %vm585, %vm561
    %vm594 = vmxor %vm586, %vm562
    %v595 = vmin.f32 %v530, %v563
    %v596 = vmin.f32 %v531, %v564
    %v597 = vmin.f32 %v532, %v565
    %v598 = vmin.f32 %v533, %v566
    %v599 = vmin.f32 %v534, %v567
    %v600 = vmin.f32 %v535, %v568
    %v601 = vmin.f32 %v536, %v569
    %v602 = vmin.f32 %v537, %v570
    %v603 = vmax.f32 %v530, %v563
    %v604 = vmax.f32 %v531, %v564
    %v605 = vmax.f32 %v532, %v565
    %v606 = vmax.f32 %v533, %v566
    %v607 = vmax.f32 %v534, %v567
    %v608 = vmax.f32 %v535, %v568
    %v609 = vmax.f32 %v536, %v569
    %v610 = vmax.f32 %v537, %v570
    %v611 = vsel %vm587, %v595, %v603
    %v612 = vsel %vm588, %v596, %v604
    %v613 = vsel %vm589, %v597, %v605
    %v614 = vsel %vm590, %v598, %v606
    %v615 = vsel %vm591, %v599, %v607
    %v616 = vsel %vm592, %v600, %v608
    %v617 = vsel %vm593, %v601, %v609
    %v618 = vsel %vm594, %v602, %v610
    %v619 = vrot.slane %v611, 2
    %v620 = vrot.slane %v612, 2
    %v621 = vrot.slane %v613, 2
    %v622 = vrot.slane %v614, 2
    %v623 = vrot.slane %v615, 2
    %v624 = vrot.slane %v616, 2
    %v625 = vrot.slane %v617, 2
    %v626 = vrot.slane %v618, 2
    %v627 = vsel %vm376, %v625, %v626
    %v628 = vsel %vm376, %v624, %v625
    %v629 = vsel %vm376, %v623, %v624
    %v630 = vsel %vm376, %v622, %v623
    %v631 = vsel %vm376, %v621, %v622
    %v632 = vsel %vm376, %v620, %v621
    %v633 = vsel %vm376, %v619, %v620
    %v634 = vsel %vm376, %v626, %v619
    %v635 = vrot.slane %v611, 6
    %v636 = vrot.slane %v612, 6
    %v637 = vrot.slane %v613, 6
    %v638 = vrot.slane %v614, 6
    %v639 = vrot.slane %v615, 6
    %v640 = vrot.slane %v616, 6
    %v641 = vrot.slane %v617, 6
    %v642 = vrot.slane %v618, 6
    %v643 = vsel %vm393, %v641, %v642
    %v644 = vsel %vm393, %v640, %v641
    %v645 = vsel %vm393, %v639, %v640
    %v646 = vsel %vm393, %v638, %v639
    %v647 = vsel %vm393, %v637, %v638
    %v648 = vsel %vm393, %v636, %v637
    %v649 = vsel %vm393, %v635, %v636
    %v650 = vsel %vm393, %v642, %v635
    %v651 = vsel %vm402, %v650, %v633
    %v652 = vsel %vm403, %v649, %v632
    %v653 = vsel %vm404, %v648, %v631
    %v654 = vsel %vm405, %v647, %v630
    %v655 = vsel %vm406, %v646, %v629
    %v656 = vsel %vm407, %v645, %v628
    %v657 = vsel %vm408, %v644, %v627
    %v658 = vsel %vm409, %v643, %v634
    %vm659 = vmxor %vm579, %vm402
    %vm660 = vmxor %vm580, %vm403
    %vm661 = vmxor %vm581, %vm404
    %vm662 = vmxor %vm582, %vm405
    %vm663 = vmxor %vm583, %vm406
    %vm664 = vmxor %vm584, %vm407
    %vm665 = vmxor %vm585, %vm408
    %vm666 = vmxor %vm586, %vm409
    %v667 = vmin.f32 %v611, %v651
    %v668 = vmin.f32 %v612, %v652
    %v669 = vmin.f32 %v613, %v653
    %v670 = vmin.f32 %v614, %v654
    %v671 = vmin.f32 %v615, %v655
    %v672 = vmin.f32 %v616, %v656
    %v673 = vmin.f32 %v617, %v657
    %v674 = vmin.f32 %v618, %v658
    %v675 = vmax.f32 %v611, %v651
    %v676 = vmax.f32 %v612, %v652
    %v677 = vmax.f32 %v613, %v653
    %v678 = vmax.f32 %v614, %v654
    %v679 = vmax.f32 %v615, %v655
    %v680 = vmax.f32 %v616, %v656
    %v681 = vmax.f32 %v617, %v657
    %v682 = vmax.f32 %v618, %v658
    %v683 = vsel %vm659, %v667, %v675
    %v684 = vsel %vm660, %v668, %v676
    %v685 = vsel %vm661, %v669, %v677
    %v686 = vsel %vm662, %v670, %v678
    %v687 = vsel %vm663, %v671, %v679
    %v688 = vsel %vm664, %v672, %v680
    %v689 = vsel %vm665, %v673, %v681
    %v690 = vsel %vm666, %v674, %v682
    %v691 = vrot.slane %v683, 1
    %v692 = vrot.slane %v684, 1
    %v693 = vrot.slane %v685, 1
    %v694 = vrot.slane %v686, 1
    %v695 = vrot.slane %v687, 1
    %v696 = vrot.slane %v688, 1
    %v697 = vrot.slane %v689, 1
    %v698 = vrot.slane %v690, 1
    %v699 = vsel %vm183, %v697, %v698
    %v700 = vsel %vm183, %v696, %v697
    %v701 = vsel %vm183, %v695, %v696
    %v702 = vsel %vm183, %v694, %v695
    %v703 = vsel %vm183, %v693, %v694
    %v704 = vsel %vm183, %v692, %v693
    %v705 = vsel %vm183, %v691, %v692
    %v706 = vsel %vm183, %v698, %v691
    %v707 = vrot.slane %v683, 7
    %v708 = vrot.slane %v684, 7
    %v709 = vrot.slane %v685, 7
    %v710 = vrot.slane %v686, 7
    %v711 = vrot.slane %v687, 7
    %v712 = vrot.slane %v688, 7
    %v713 = vrot.slane %v689, 7
    %v714 = vrot.slane %v690, 7
    %v715 = vsel %vm287, %v713, %v714
    %v716 = vsel %vm287, %v712, %v713
    %v717 = vsel %vm287, %v711, %v712
    %v718 = vsel %vm287, %v710, %v711
    %v719 = vsel %vm287, %v709, %v710
    %v720 = vsel %vm287, %v708, %v709
    %v721 = vsel %vm287, %v707, %v708
    %v722 = vsel %vm287, %v714, %v707
    %v723 = vsel %vm304, %v722, %v705
    %v724 = vsel %vm305, %v721, %v704
    %v725 = vsel %vm306, %v720, %v703
    %v726 = vsel %vm307, %v719, %v702
    %v727 = vsel %vm308, %v718, %v701
    %v728 = vsel %vm309, %v717, %v700
    %v729 = vsel %vm310, %v716, %v699
    %v730 = vsel %vm311, %v715, %v706
    %vm731 = vmxor %vm579, %vm304
    %vm732 = vmxor %vm580, %vm305
    %vm733 = vmxor %vm581, %vm306
    %vm734 = vmxor %vm582, %vm307
    %vm735 = vmxor %vm583, %vm308
    %vm736 = vmxor %vm584, %vm309
    %vm737 = vmxor %vm585, %vm310
    %vm738 = vmxor %vm586, %vm311
    %v739 = vmin.f32 %v683, %v723
    %v740 = vmin.f32 %v684, %v724
    %v741 = vmin.f32 %v685, %v725
    %v742 = vmin.f32 %v686, %v726
    %v743 = vmin.f32 %v687, %v727
    %v744 = vmin.f32 %v688, %v728
    %v745 = vmin.f32 %v689, %v729
    %v746 = vmin.f32 %v690, %v730
    %v747 = vmax.f32 %v683, %v723
    %v748 = vmax.f32 %v684, %v724
    %v749 = vmax.f32 %v685, %v725
    %v750 = vmax.f32 %v686, %v726
    %v751 = vmax.f32 %v687, %v727
    %v752 = vmax.f32 %v688, %v728
    %v753 = vmax.f32 %v689, %v729
    %v754 = vmax.f32 %v690, %v730
    %v755 = vsel %vm731, %v739, %v747
    %v756 = vsel %vm732, %v740, %v748
    %v757 = vsel %vm733, %v741, %v749
    %v758 = vsel %vm734, %v742, %v750
    %v759 = vsel %vm735, %v743, %v751
    %v760 = vsel %vm736, %v744, %v752
    %v761 = vsel %vm737, %v745, %v753
    %v762 = vsel %vm738, %v746, %v754
    %vm763 = vcmp.ne.s32.totalorder %v571, 0
    %vm764 = vcmp.ne.s32.totalorder %v572, 0
    %vm765 = vcmp.ne.s32.totalorder %v573, 0
    %vm766 = vcmp.ne.s32.totalorder %v574, 0
    %vm767 = vcmp.ne.s32.totalorder %v575, 0
    %vm768 = vcmp.ne.s32.totalorder %v576, 0
    %vm769 = vcmp.ne.s32.totalorder %v577, 0
    %vm770 = vcmp.ne.s32.totalorder %v578, 0
    %v771 = vsel %vm763, %v762, %v756
    %v772 = vsel %vm764, %v755, %v757
    %v773 = vsel %vm765, %v756, %v758
    %v774 = vsel %vm766, %v757, %v759
    %v775 = vsel %vm767, %v758, %v760
    %v776 = vsel %vm768, %v759, %v761
    %v777 = vsel %vm769, %v760, %v762
    %v778 = vsel %vm770, %v761, %v755
    %vm779 = vmxor %vm763, 1
    %vm780 = vmxor %vm764, 1
    %vm781 = vmxor %vm765, 1
    %vm782 = vmxor %vm766, 1
    %vm783 = vmxor %vm767, 1
    %vm784 = vmxor %vm768, 1
    %vm785 = vmxor %vm769, 1
    %vm786 = vmxor %vm770, 1
    %v787 = vmin.f32 %v755, %v771
    %v788 = vmin.f32 %v756, %v772
    %v789 = vmin.f32 %v757, %v773
    %v790 = vmin.f32 %v758, %v774
    %v791 = vmin.f32 %v759, %v775
    %v792 = vmin.f32 %v760, %v776
    %v793 = vmin.f32 %v761, %v777
    %v794 = vmin.f32 %v762, %v778
    %v795 = vmax.f32 %v755, %v771
    %v796 = vmax.f32 %v756, %v772
    %v797 = vmax.f32 %v757, %v773
    %v798 = vmax.f32 %v758, %v774
    %v799 = vmax.f32 %v759, %v775
    %v800 = vmax.f32 %v760, %v776
    %v801 = vmax.f32 %v761, %v777
    %v802 = vmax.f32 %v762, %v778
    %v803 = vsel %vm779, %v787, %v795
    %v804 = vsel %vm780, %v788, %v796
    %v805 = vsel %vm781, %v789, %v797
    %v806 = vsel %vm782, %v790, %v798
    %v807 = vsel %vm783, %v791, %v799
    %v808 = vsel %vm784, %v792, %v800
    %v809 = vsel %vm785, %v793, %v801
    %v810 = vsel %vm786, %v794, %v802
    %v811 = vrot.slane %v803, 4
    %v812 = vrot.slane %v804, 4
    %v813 = vrot.slane %v805, 4
    %v814 = vrot.slane %v806, 4
    %v815 = vrot.slane %v807, 4
    %v816 = vrot.slane %v808, 4
    %v817 = vrot.slane %v809, 4
    %v818 = vrot.slane %v810, 4
    %v819 = vsel %vm546, %v817, %v818
    %v820 = vsel %vm546, %v816, %v817
    %v821 = vsel %vm546, %v815, %v816
    %v822 = vsel %vm546, %v814, %v815
    %v823 = vsel %vm546, %v813, %v814
    %v824 = vsel %vm546, %v812, %v813
    %v825 = vsel %vm546, %v811, %v812
    %v826 = vsel %vm546, %v818, %v811
    %v827 = vsel %vm555, %v826, %v825
    %v828 = vsel %vm556, %v825, %v824
    %v829 = vsel %vm557, %v824, %v823
    %v830 = vsel %vm558, %v823, %v822
    %v831 = vsel %vm559, %v822, %v821
    %v832 = vsel %vm560, %v821, %v820
    %v833 = vsel %vm561, %v820, %v819
    %v834 = vsel %vm562, %v819, %v826
    %vm835 = vmxor %vm555, 1
    %vm836 = vmxor %vm556, 1
    %vm837 = vmxor %vm557, 1
    %vm838 = vmxor %vm558, 1
    %vm839 = vmxor %vm559, 1
    %vm840 = vmxor %vm560, 1
    %vm841 = vmxor %vm561, 1
    %vm842 = vmxor %vm562, 1
    %v843 = vmin.f32 %v803, %v827
    %v844 = vmin.f32 %v804, %v828
    %v845 = vmin.f32 %v805, %v829
    %v846 = vmin.f32 %v806, %v830
    %v847 = vmin.f32 %v807, %v831
    %v848 = vmin.f32 %v808, %v832
    %v849 = vmin.f32 %v809, %v833
    %v850 = vmin.f32 %v810, %v834
    %v851 = vmax.f32 %v803, %v827
    %v852 = vmax.f32 %v804, %v828
    %v853 = vmax.f32 %v805, %v829
    %v854 = vmax.f32 %v806, %v830
    %v855 = vmax.f32 %v807, %v831
    %v856 = vmax.f32 %v808, %v832
    %v857 = vmax.f32 %v809, %v833
    %v858 = vmax.f32 %v810, %v834
    %v859 = vsel %vm835, %v843, %v851
    %v860 = vsel %vm836, %v844, %v852
    %v861 = vsel %vm837, %v845, %v853
    %v862 = vsel %vm838, %v846, %v854
    %v863 = vsel %vm839, %v847, %v855
    %v864 = vsel %vm840, %v848, %v856
    %v865 = vsel %vm841, %v849, %v857
    %v866 = vsel %vm842, %v850, %v858
    %v867 = vrot.slane %v859, 2
    %v868 = vrot.slane %v860, 2
    %v869 = vrot.slane %v861, 2
    %v870 = vrot.slane %v862, 2
    %v871 = vrot.slane %v863, 2
    %v872 = vrot.slane %v864, 2
    %v873 = vrot.slane %v865, 2
    %v874 = vrot.slane %v866, 2
    %v875 = vsel %vm376, %v873, %v874
    %v876 = vsel %vm376, %v872, %v873
    %v877 = vsel %vm376, %v871, %v872
    %v878 = vsel %vm376, %v870, %v871
    %v879 = vsel %vm376, %v869, %v870
    %v880 = vsel %vm376, %v868, %v869
    %v881 = vsel %vm376, %v867, %v868
    %v882 = vsel %vm376, %v874, %v867
    %v883 = vrot.slane %v859, 6
    %v884 = vrot.slane %v860, 6
    %v885 = vrot.slane %v861, 6
    %v886 = vrot.slane %v862, 6
    %v887 = vrot.slane %v863, 6
    %v888 = vrot.slane %v864, 6
    %v889 = vrot.slane %v865, 6
    %v890 = vrot.slane %v866, 6
    %v891 = vsel %vm393, %v889, %v890
    %v892 = vsel %vm393, %v888, %v889
    %v893 = vsel %vm393, %v887, %v888
    %v894 = vsel %vm393, %v886, %v887
    %v895 = vsel %vm393, %v885, %v886
    %v896 = vsel %vm393, %v884, %v885
    %v897 = vsel %vm393, %v883, %v884
    %v898 = vsel %vm393, %v890, %v883
    %v899 = vsel %vm402, %v898, %v881
    %v900 = vsel %vm403, %v897, %v880
    %v901 = vsel %vm404, %v896, %v879
    %v902 = vsel %vm405, %v895, %v878
    %v903 = vsel %vm406, %v894, %v877
    %v904 = vsel %vm407, %v893, %v876
    %v905 = vsel %vm408, %v892, %v875
    %v906 = vsel %vm409, %v891, %v882
    %vm907 = vmxor %vm402, 1
    %vm908 = vmxor %vm403, 1
    %vm909 = vmxor %vm404, 1
    %vm910 = vmxor %vm405, 1
    %vm911 = vmxor %vm406, 1
    %vm912 = vmxor %vm407, 1
    %vm913 = vmxor %vm408, 1
    %vm914 = vmxor %vm409, 1
    %v915 = vmin.f32 %v859, %v899
    %v916 = vmin.f32 %v860, %v900
    %v917 = vmin.f32 %v861, %v901
    %v918 = vmin.f32 %v862, %v902
    %v919 = vmin.f32 %v863, %v903
    %v920 = vmin.f32 %v864, %v904
    %v921 = vmin.f32 %v865, %v905
    %v922 = vmin.f32 %v866, %v906
    %v923 = vmax.f32 %v859, %v899
    %v924 = vmax.f32 %v860, %v900
    %v925 = vmax.f32 %v861, %v901
    %v926 = vmax.f32 %v862, %v902
    %v927 = vmax.f32 %v863, %v903
    %v928 = vmax.f32 %v864, %v904
    %v929 = vmax.f32 %v865, %v905
    %v930 = vmax.f32 %v866, %v906
    %v931 = vsel %vm907, %v915, %v923
    %v932 = vsel %vm908, %v916, %v924
    %v933 = vsel %vm909, %v917, %v925
    %v934 = vsel %vm910, %v918, %v926
    %v935 = vsel %vm911, %v919, %v927
    %v936 = vsel %vm912, %v920, %v928
    %v937 = vsel %vm913, %v921, %v929
    %v938 = vsel %vm914, %v922, %v930
    %v939 = vrot.slane %v931, 1
    %v940 = vrot.slane %v932, 1
    %v941 = vrot.slane %v933, 1
    %v942 = vrot.slane %v934, 1
    %v943 = vrot.slane %v935, 1
    %v944 = vrot.slane %v936, 1
    %v945 = vrot.slane %v937, 1
    %v946 = vrot.slane %v938, 1
    %v947 = vsel %vm183, %v945, %v946
    %v948 = vsel %vm183, %v943, %v944
    %v949 = vsel %vm183, %v941, %v942
    %v950 = vsel %vm183, %v939, %v940
    %v951 = vrot.slane %v931, 7
    %v952 = vrot.slane %v932, 7
    %v953 = vrot.slane %v933, 7
    %v954 = vrot.slane %v934, 7
    %v955 = vrot.slane %v935, 7
    %v956 = vrot.slane %v936, 7
    %v957 = vrot.slane %v937, 7
    %v958 = vrot.slane %v938, 7
    %v959 = vsel %vm287, %v956, %v957
    %v960 = vsel %vm287, %v954, %v955
    %v961 = vsel %vm287, %v952, %v953
    %v962 = vsel %vm287, %v958, %v951
    %v963 = vsel %vm304, %v962, %v950
    %v964 = vsel %vm306, %v961, %v949
    %v965 = vsel %vm308, %v960, %v948
    %v966 = vsel %vm310, %v959, %v947
    %vm967 = vmxor %vm304, 1
    %vm968 = vmxor %vm306, 1
    %vm969 = vmxor %vm308, 1
    %vm970 = vmxor %vm310, 1
    %v971 = vmin.f32 %v931, %v963
    %v972 = vmin.f32 %v933, %v964
    %v973 = vmin.f32 %v935, %v965
    %v974 = vmin.f32 %v937, %v966
    %v975 = vmax.f32 %v931, %v963
    %v976 = vmax.f32 %v933, %v964
    %v977 = vmax.f32 %v935, %v965
    %v978 = vmax.f32 %v937, %v966
    %v979 = vsel %vm967, %v971, %v975
    %v980 = vsel %vm968, %v972, %v976
    %v981 = vsel %vm969, %v973, %v977
    %v982 = vsel %vm970, %v974, %v978
    %v983 = vlaneseq
    %v984 = vand.u32 %v983, 127
    %vm985 = vcmp.lt.s32.totalorder %v984, 33
    %v986 = vsel %vm985, %v981, 1.0
    %v987 = vrcp.pop %v986
    %v988 = vmul.f32 %v979, %v987
    %v989 = vsel %vm985, %v988, 0.0
    %v991 = vrot.slane %v989, 7
    %vm993 = vcmask 1040384
    %v994 = vsel %vm993, %v991, 0.0
    %995 = vadd.xlane.f32.xlu0 %v994
    %v996 = vpop.xlane.xlu0 %995
    %v997 = vrot.slane %v996, 4
    %v998 = vadd.f32 %v996, %v997
    %v999 = vrot.slane %v998, 2
    %v1000 = vadd.f32 %v998, %v999
    %v1001 = vrot.slane %v1000, 1
    %v1002 = vadd.f32 %v1000, %v1001
    %s1003 = vtos %v1002
    %s1004 = sadd.f32 %s1003, 0.0
    %v1005 = vsel %vm985, %v982, 1.0
    %v1006 = vrcp.pop %v1005
    %v1007 = vmul.f32 %v980, %v1006
    %v1008 = vsel %vm985, %v1007, 0.0
    %v1010 = vrot.slane %v1008, 7
    %v1012 = vsel %vm993, %v1010, 0.0
    %1013 = vadd.xlane.f32.xlu0 %v1012
    %v1014 = vpop.xlane.xlu0 %1013
    %v1015 = vrot.slane %v1014, 4
    %v1016 = vadd.f32 %v1014, %v1015
    %v1017 = vrot.slane %v1016, 2
    %v1018 = vadd.f32 %v1016, %v1017
    %v1019 = vrot.slane %v1018, 1
    %v1020 = vadd.f32 %v1018, %v1019
    %s1021 = vtos %v1020
    %s1022 = sadd.f32 %s1004, %s1021
    %v1023 = vrcp.pop 66.0
    %s1024 = vtos %v1023
    %s1025 = smul.f32 %s1022, %s1024
    %v1026 = vmul.f32 %v23, %v23
    %v1027 = vmul.f32 %v24, %v24
    %v1028 = vmul.f32 %v25, %v25
    %v1029 = vmul.f32 %v26, %v26
    %v1030 = vsel %vm35, %v1026, 0.0
    %v1031 = vsel %vm35, %v1027, 0.0
    %v1032 = vadd.f32 %v1030, %v1031
    %v1033 = vsel %vm35, %v1028, 0.0
    %v1034 = vadd.f32 %v1032, %v1033
    %v1035 = vsel %vm35, %v1029, 0.0
    %v1036 = vadd.f32 %v1034, %v1035
    %1037 = vadd.xlane.f32.xlu0 %v1036
    %v1038 = vpop.xlane.xlu0 %1037
    %v1039 = vrot.slane %v1038, 4
    %v1040 = vadd.f32 %v1038, %v1039
    %v1041 = vrot.slane %v1040, 2
    %v1042 = vadd.f32 %v1040, %v1041
    %v1043 = vrot.slane %v1042, 1
    %v1044 = vadd.f32 %v1042, %v1043
    %s1045 = vtos %v1044
    %v1046 = vrcp.pop 1024.0
    %s1047 = vtos %v1046
    %s1048 = smul.f32 %s1045, %s1047
    %s1049 = smul.f32 %s1025, 0.5
    %s1050 = smul.f32 %s1048, 0.5
    %s1051 = sadd.f32 %s1049, %s1050
    %s1052 = scalar_lea.smem [#allocation2], 0
    %1053 = sst [smem:[%s1052]] %s1051
    // Predicated region
    $region14: #{composite_psd_loss.1} parent=1 // pred_check
      _
    $region15: #{composite_psd_loss.1} parent=1 // pred_check_branch
      %1055 = sbr.rel (0) target = $region17
    $region16: #{composite_psd_loss.1} parent=1 // pred_region
      %s1057 = ssub.s32 16, 16
      %1058 = vsyncadd [#allocation3], %s1057
      %1061 = dma.smem_to_hbm [#allocation2], 16, %s3, [#allocation3]
    $region17: #{composite_psd_loss.1} parent=1 // pred_fallthru
      _
    // Predicated region
    $region18: #{composite_psd_loss.1} parent=1 // pred_check
      _
    $region19: #{composite_psd_loss.1} parent=1 // pred_check_branch
      %1063 = sbr.rel (0) target = $region21
    $region20: #{composite_psd_loss.1} parent=1 // pred_region
      %1064 = dma.done [#allocation3], 16
    $region21: #{composite_psd_loss.1} parent=1 // pred_fallthru
      _
    %1065 = sfence
    %1066 = vsyncpa [#allocation3], 1

</llo_original>
